<compile_context>
chip_gen: v5e
topology: v5e:2x2
jax: 0.10.0
libtpu: 0.0.40
codegen_flags: <defaults>
</compile_context>

<pallas_src>
import jax
import jax.numpy as jnp
import numpy as np
from jax.experimental import pallas as pl
from jax.experimental.pallas import tpu as pltpu


_TARGET_CHUNK_BYTES = 2 * 1024 * 1024   # split copies bigger than ~2 MiB
_MAX_DMA_CHUNKS = 8                     # at most 8 concurrent DMAs in flight


def _make_copy_kernel(chunk_bounds):
    """Kernel: start all HBM->HBM chunk DMAs, then wait on them all."""

    def kernel(x_hbm, o_hbm, copy_sems):
        if chunk_bounds is None:
            copies = [pltpu.make_async_copy(x_hbm, o_hbm, copy_sems.at[0])]
        else:
            copies = [
                pltpu.make_async_copy(
                    x_hbm.at[pl.ds(start, size)],
                    o_hbm.at[pl.ds(start, size)],
                    copy_sems.at[idx],
                )
                for idx, (start, size) in enumerate(chunk_bounds)
            ]
        for cp in copies:          # issue everything first -> concurrent DMAs
            cp.start()
        for cp in copies:
            cp.wait()

    return kernel


def _chunk_bounds(dim0, nbytes, itemsize, target_chunk_bytes, max_chunks):
    """Static (start, size) chunks along axis 0, or None for one whole-array DMA."""
    if dim0 < 2 or nbytes <= target_chunk_bytes:
        return None
    num_chunks = int(min(max_chunks, dim0, max(2, nbytes // target_chunk_bytes)))
    # Align chunk rows to the dtype's sublane packing so chunk DMAs stay dense
    # when axis 0 is the sublane axis (perf only; any split is correct).
    row_align = 8 * max(1, 4 // max(1, itemsize))   # 8 f32 / 16 bf16 / 32 int8
    base, rem = divmod(dim0, num_chunks)
    if base >= row_align:
        aligned = (base // row_align) * row_align
        sizes = [aligned] * (num_chunks - 1) + [dim0 - aligned * (num_chunks - 1)]
    else:
        sizes = [base + (1 if i < rem else 0) for i in range(num_chunks)]
    bounds, start = [], 0
    for size in sizes:
        bounds.append((start, size))
        start += size
    return tuple(bounds)


def direct_fwd(x, *, donate=False, target_chunk_bytes=_TARGET_CHUNK_BYTES,
               max_chunks=_MAX_DMA_CHUNKS):
    """Identity forward (DirectFwd) as a direct HBM->HBM DMA copy."""
    if x.size == 0:
        return x
    orig_shape = x.shape
    x_work = x if x.ndim >= 1 else x.reshape(1)

    # TODO(synk): sub-byte dtypes (int4/fp4) make the byte math approximate;
    # this only affects the chunk-count choice, never correctness.
    itemsize = jnp.dtype(x_work.dtype).itemsize
    nbytes = x_work.size * itemsize
    bounds = _chunk_bounds(x_work.shape[0], nbytes, itemsize,
                           target_chunk_bytes, max_chunks)
    num_sems = 1 if bounds is None else len(bounds)

    out = pl.pallas_call(
        _make_copy_kernel(bounds),
        out_shape=jax.ShapeDtypeStruct(x_work.shape, x_work.dtype),
        in_specs=[pl.BlockSpec(memory_space=pl.ANY)],
        out_specs=pl.BlockSpec(memory_space=pl.ANY),
        scratch_shapes=[pltpu.SemaphoreType.DMA((num_sems,))],
        # Only alias when the caller actually donates x; otherwise XLA inserts a
        # defensive copy and total HBM traffic doubles.
        input_output_aliases=({0: 0} if donate else {}),
    )(x_work)

    return out if out.shape == orig_shape else out.reshape(orig_shape)


if __name__ == "__main__":
    # DirectFwd has no parameters (empty __init__), so nothing to initialize.
    key = jax.random.PRNGKey(0)
    x = jax.random.normal(key, (2, 4, 16, 16), dtype=jnp.float32)  # NCHW

    # Host-side reference copy taken before the call (stays valid even if a
    # caller donates x).
    x_host = np.asarray(jax.device_get(x))

    y = jax.block_until_ready(direct_fwd(x))
    assert y.shape == tuple(x_host.shape) and y.dtype == x_host.dtype
    assert np.array_equal(np.asarray(jax.device_get(y)), x_host)

    # Also exercise the multi-chunk concurrent-DMA path on a small array by
    # shrinking the per-chunk byte target.
    x2 = jax.random.normal(jax.random.PRNGKey(0), (64, 64), dtype=jnp.float32)
    x2_host = np.asarray(jax.device_get(x2))
    y2 = jax.block_until_ready(direct_fwd(x2, target_chunk_bytes=4096, max_chunks=4))
    assert np.array_equal(np.asarray(jax.device_get(y2)), x2_host)

    print("KERNEL_OK")
</pallas_src>

<mosaic_0001>
module attributes {stable_mosaic.version = 11 : i64} {
  func.func @kernel(%arg0: memref<2x4x16x16xf32, #tpu.memory_space<any>>, %arg1: memref<2x4x16x16xf32, #tpu.memory_space<any>>, %arg2: memref<1x!tpu.dma_semaphore, #tpu.memory_space<semaphore_mem>>) attributes {dimension_semantics = [], scalar_prefetch = 0 : i64, scratch_operands = 1 : i64, tpu.core_type = #tpu.core_type<tc>} {
    %c0_i32 = arith.constant 0 : i32
    %0 = tpu.memref_slice %arg2[%c0_i32] : memref<1x!tpu.dma_semaphore, #tpu.memory_space<semaphore_mem>> -> memref<1x!tpu.dma_semaphore, #tpu.memory_space<semaphore_mem>>
    %1 = tpu.memref_squeeze %0 : memref<1x!tpu.dma_semaphore, #tpu.memory_space<semaphore_mem>> -> memref<!tpu.dma_semaphore, #tpu.memory_space<semaphore_mem>>
    tpu.enqueue_dma source(%arg0 : memref<2x4x16x16xf32, #tpu.memory_space<any>>) target(%arg1 : memref<2x4x16x16xf32, #tpu.memory_space<any>>) target_semaphore(%1 : memref<!tpu.dma_semaphore, #tpu.memory_space<semaphore_mem>>)
    %c0_i32_0 = arith.constant 0 : i32
    %2 = tpu.memref_slice %arg2[%c0_i32_0] : memref<1x!tpu.dma_semaphore, #tpu.memory_space<semaphore_mem>> -> memref<1x!tpu.dma_semaphore, #tpu.memory_space<semaphore_mem>>
    %3 = tpu.memref_squeeze %2 : memref<1x!tpu.dma_semaphore, #tpu.memory_space<semaphore_mem>> -> memref<!tpu.dma_semaphore, #tpu.memory_space<semaphore_mem>>
    tpu.wait_dma2 semaphore(%3 : memref<!tpu.dma_semaphore, #tpu.memory_space<semaphore_mem>>) src(%arg0 : memref<2x4x16x16xf32, #tpu.memory_space<any>>) dst(%arg1 : memref<2x4x16x16xf32, #tpu.memory_space<any>>)
    return
  }
}

</mosaic_0001>

<llo_original>
// kernel: tpu_custom_call.1
$region0: #{tpu_custom_call.1}
  #allocation0 [shape = 'u32[]', space=smem, size = 0x4, offset = 0x4, fixed_abs, tag = 'smem constant byte address 0x4 - core index']
  #allocation1 [shape = 'u32[72,128]{1,0:T(1,128)}', space=vmem, size = 0x9000, scoped, tag = 'internal scratch']
  #allocation2 [shape = 's32[1]{0}', space=sflag, size = 0x4, scoped, tag = 'scratch operand']
  #allocation3 [shape = 's32[]', space=sflag, size = 0x4, offset = 0, fixed_abs, tag = 'sflag constant byte address 0x0 - dummy sync flag']
  #allocation4 [shape = 'u32[0]{0}', space=smem, size = 0, offset = 0, fixed_abs, tag = 'smem constant byte address 0x0 - null']
  %s0 = inlined_call_operand.hbm [shape: f32[2,4,16,16], index: 0, kind: input, shape index: {}]
  %s1 = inlined_call_operand.hbm [shape: f32[2,4,16,16], index: 1, kind: output, shape index: {}]
  %s2 = sld [smem:[#allocation0]]
  $region2: #{tpu_custom_call.1} parent=0
    _
  %s4 = ssub.s32 1, %s2
  %s5 = scalar_select 0, %s4, %s2
  %s7 = sshll.u32 1, 14
  %s8 = sxor.u32 4294967295, %s7
  %s10 = sshll.u32 %s0, 4
  %s11 = int_to_ptr.hbm [resolvable:$true] %s10
  %s12 = sshll.u32 %s1, 4
  %s13 = int_to_ptr.hbm [resolvable:$true] %s12
  %16 = dma.general %s11, 2048, %s13, [#allocation2], [#allocation3], [#allocation4], 0, 0
  %s17 = smul.u32 2, 4
  %s18 = smul.u32 %s17, 16
  %s19 = smul.u32 %s18, 1
  %s20 = sshll.u32 %s19, 4
  %21 = dma.done [#allocation2], %s20
  %22 = vsyncmov [#allocation2]
  %s23 = vpop.sfrf %22
  %p24 = scmp.eq.s32.totalorder %s23, 0
  %p25 = pneg %p24
  %27 = shalt.err (%p25)

</llo_original>
